<compile_context>
chip_gen: v6e
topology: v6e:2x2x1
jax: 0.10.0
libtpu: 0.0.40
codegen_flags: <defaults>
</compile_context>

<pallas_src>
import functools
import math

import numpy as np
import jax
import jax.numpy as jnp
from jax.experimental import pallas as pl
from jax.experimental.pallas import tpu as pltpu

LANE = 128
SUB = 8


# ----------------------------------------------------------------------------
# PE table: computed once per (seq_len, d_model) on the host and cached.
# ----------------------------------------------------------------------------
@functools.lru_cache(maxsize=None)
def _pe_table_np(seq_len: int, d_model: int) -> np.ndarray:
    """Sinusoidal positional-encoding table, shape (seq_len, d_model), float32."""
    position = np.arange(seq_len, dtype=np.float32)[:, None]                  # (S, 1)
    div_term = np.exp(np.arange(0, d_model, 2, dtype=np.float32)
                      * (-math.log(10000.0) / d_model))                       # (ceil(D/2),)
    angles = position * div_term[None, :]                                     # (S, ceil(D/2))
    pe = np.zeros((seq_len, d_model), dtype=np.float32)
    pe[:, 0::2] = np.sin(angles)
    pe[:, 1::2] = np.cos(angles[:, : d_model // 2])   # matches PyTorch for even D
    return pe


# ----------------------------------------------------------------------------
# Kernel: VPU elementwise scale + broadcast add, computed in f32, cast at store.
# ----------------------------------------------------------------------------
def _pe_kernel(x_ref, pe_ref, o_ref, *, scale: float):
    # x_ref: (tb, tc) in x.dtype, pe_ref: (1, tc) f32 (resident across the row sweep),
    # o_ref: (tb, tc) in x.dtype; all lane-dense in the last dim.
    x = x_ref[...].astype(jnp.float32)
    y = x * jnp.float32(scale) + pe_ref[...]
    o_ref[...] = y.astype(o_ref.dtype)


# ----------------------------------------------------------------------------
# Hardware-aware sizing helpers.
# ----------------------------------------------------------------------------
def _vmem_capacity_bytes() -> int:
    try:
        cap = getattr(pltpu.get_tpu_info(), "vmem_capacity_bytes", None)
        if cap:
            return int(cap)
    except Exception:
        pass
    return 64 << 20  # conservative default (v7x per-TC VMEM)


def _largest_divisor_tile(total: int, quantum: int, max_tile: int):
    """Largest multiple of `quantum` that divides `total` and is <= max_tile (or None)."""
    if total % quantum != 0:
        return None
    t = min(total, max(quantum, (max_tile // quantum) * quantum))
    t -= t % quantum
    while t >= quantum and total % t != 0:
        t -= quantum
    return t if t >= quantum else None


def _choose_tiles(B: int, C: int, itemsize: int, tile_budget: int):
    """Pick (tb, tc) for the flattened (B, C) problem. C must be a multiple of 128."""
    # Column tile: lane-dense divisor of C sized so even an 8-row tile fits the budget.
    max_tc = max(LANE, tile_budget // (SUB * itemsize))
    tc = _largest_divisor_tile(C, LANE, max_tc) or C

    # Row tile: multiple of 8 dividing B (else full B) keeping tb*tc within budget.
    max_tb = max(SUB, tile_budget // (tc * itemsize))
    tb = _largest_divisor_tile(B, SUB, max_tb) or B

    # If B was forced to a single (non multiple-of-8) row block, re-shrink columns.
    if tb * tc * itemsize > tile_budget:
        tc = _largest_divisor_tile(C, LANE, max(LANE, tile_budget // (tb * itemsize))) or tc

    # v7x megacore: guarantee >= 2 grid steps along a parallel axis so both
    # TensorCores get work; prefer splitting columns (stays lane-dense).
    if (B // tb) * (C // tc) == 1:
        if tc % (2 * LANE) == 0:
            tc //= 2
        elif tb % (2 * SUB) == 0:
            tb //= 2
    return tb, tc


# ----------------------------------------------------------------------------
# Forward wrapper (eval-mode: dropout is identity).
# ----------------------------------------------------------------------------
def positional_encodings_forward(x: jnp.ndarray, d_model: int, seq_len: int,
                                 dropout: float = 0.0,
                                 donate_input: bool = False) -> jnp.ndarray:
    """Equivalent of PositionalEncodings.forward in eval mode. x: (B, S, D), S <= seq_len."""
    B, S, D = x.shape
    assert D == d_model and S <= seq_len

    scale = math.sqrt(d_model)
    pe_f32 = jnp.asarray(_pe_table_np(seq_len, d_model)[:S, :], dtype=jnp.float32)  # (S, D)

    # Flatten to a lane-dense 2D problem: (B, S*D); last dim large & contiguous.
    C = S * D
    x2 = x.reshape(B, C)
    pe2 = pe_f32.reshape(1, C)

    # Pad the flattened dim to a multiple of 128 so output stores are unmasked vst.
    C_pad = -(-C // LANE) * LANE
    if C_pad != C:
        x2 = jnp.pad(x2, ((0, 0), (0, C_pad - C)))
        pe2 = jnp.pad(pe2, ((0, 0), (0, C_pad - C)))

    itemsize = x.dtype.itemsize
    vmem_cap = _vmem_capacity_bytes()
    tile_budget = max(2 << 20, vmem_cap // 8)          # ~8 MiB on v7x, ~16 MiB on v5e/v6e
    tb, tc = _choose_tiles(B, C_pad, itemsize, tile_budget)

    # Exact double-buffer footprint (x + out tiles, PE slab in f32) + 25% margin,
    # clamped to 75% of physical VMEM for this generation.
    tile_bytes = tb * tc * itemsize
    footprint = 4 * tile_bytes + 2 * tc * 4
    vmem_limit = int(min(max(int(footprint * 1.25), 8 << 20), int(vmem_cap * 0.75)))

    # Column axis OUTERMOST: the PE block index is constant across the inner row sweep,
    # so the PE slab stays resident in VMEM and is DMA'd only C_pad//tc times total.
    grid = (C_pad // tc, B // tb)

    cost = pl.CostEstimate(flops=2 * B * C_pad, transcendentals=0,
                           bytes_accessed=2 * B * C_pad * itemsize + C_pad * 4)

    out2 = pl.pallas_call(
        functools.partial(_pe_kernel, scale=scale),
        out_shape=jax.ShapeDtypeStruct((B, C_pad), x.dtype),
        grid=grid,
        in_specs=[
            pl.BlockSpec((tb, tc), lambda j, i: (i, j)),   # x row/col tile
            pl.BlockSpec((1, tc), lambda j, i: (0, j)),    # PE column slab (resident over rows)
        ],
        out_specs=pl.BlockSpec((tb, tc), lambda j, i: (i, j)),
        compiler_params=pltpu.CompilerParams(
            dimension_semantics=("parallel", "parallel"),
            vmem_limit_bytes=vmem_limit,
        ),
        cost_estimate=cost,
        input_output_aliases=({0: 0} if donate_input else {}),
    )(x2, pe2)

    if C_pad != C:
        out2 = out2[:, :C]

    # TODO(synk): training-mode dropout (inverted mask via pltpu.prng_seed/prng_random_bits
    # keyed on program_id) not implemented; nn.Dropout is identity at inference.
    return out2.reshape(B, S, D)


if __name__ == "__main__":
    d_model, seq_len, batch = 32, 8, 2

    key = jax.random.PRNGKey(0)
    x = jax.random.normal(key, (batch, seq_len, d_model), dtype=jnp.float32)

    out = jax.block_until_ready(
        positional_encodings_forward(x, d_model=d_model, seq_len=seq_len, dropout=0.1))

    # Reference (eval-mode dropout == identity).
    pe_ref = jnp.asarray(_pe_table_np(seq_len, d_model))
    ref = x * math.sqrt(d_model) + pe_ref[None, :, :]
    assert jnp.allclose(out, ref, atol=1e-5, rtol=1e-5), "f32 mismatch vs reference"

    # bf16 path: same kernel (f32 compute in-kernel, bf16 in/out -> half the bytes moved).
    x_bf16 = x.astype(jnp.bfloat16)
    out_bf16 = jax.block_until_ready(
        positional_encodings_forward(x_bf16, d_model=d_model, seq_len=seq_len))
    ref_bf16 = (x_bf16.astype(jnp.float32) * math.sqrt(d_model) + pe_ref[None, :, :])
    assert jnp.allclose(out_bf16.astype(jnp.float32), ref_bf16, atol=1e-1, rtol=5e-2), \
        "bf16 mismatch vs reference"

    print("KERNEL_OK")
</pallas_src>

<mosaic_0001>
module attributes {stable_mosaic.version = 11 : i64} {
  func.func @_pe_kernel(%arg0: i32, %arg1: i32, %arg2: memref<2x128xf32, #tpu.memory_space<vmem>>, %arg3: memref<1x128xf32, #tpu.memory_space<vmem>>, %arg4: memref<2x128xf32, #tpu.memory_space<vmem>>) attributes {dimension_semantics = [#tpu.dimension_semantics<parallel>, #tpu.dimension_semantics<parallel>], iteration_bounds = array<i64: 2, 1>, scalar_prefetch = 0 : i64, scratch_operands = 0 : i64, tpu.core_type = #tpu.core_type<tc>, window_params = [{transform_indices = @transform_0, window_bounds = array<i64: 2, 128>}, {transform_indices = @transform_1, window_bounds = array<i64: 1, 128>}, {transform_indices = @transform_2, window_bounds = array<i64: 2, 128>}]} {
    %c0 = arith.constant 0 : index
    %c0_0 = arith.constant 0 : index
    %0 = vector.load %arg2[%c0, %c0_0] : memref<2x128xf32, #tpu.memory_space<vmem>>, vector<2x128xf32>
    %cst = arith.constant 5.65685415 : f32
    %1 = vector.broadcast %cst : f32 to vector<2x128xf32>
    %2 = arith.mulf %0, %1 : vector<2x128xf32>
    %c0_1 = arith.constant 0 : index
    %c0_2 = arith.constant 0 : index
    %3 = vector.load %arg3[%c0_1, %c0_2] : memref<1x128xf32, #tpu.memory_space<vmem>>, vector<1x128xf32>
    %4 = vector.broadcast %3 : vector<1x128xf32> to vector<2x128xf32>
    %5 = arith.addf %2, %4 : vector<2x128xf32>
    %c0_3 = arith.constant 0 : index
    %c0_4 = arith.constant 0 : index
    %6 = vector.load %arg4[%c0_3, %c0_4] : memref<2x128xf32, #tpu.memory_space<vmem>>, vector<2x128xf32>
    tpu.vector_store %arg4[%c0_3, %c0_4], %5 {strides = array<i32>} : memref<2x128xf32, #tpu.memory_space<vmem>>, vector<2x128xf32>,
    return
  }
  func.func @transform_0(%arg0: i32, %arg1: i32) -> (i32, i32) {
    %c0_i32 = arith.constant 0 : i32
    return %arg1, %arg0 : i32, i32
  }
  func.func @transform_1(%arg0: i32, %arg1: i32) -> (i32, i32) {
    %c0_i32 = arith.constant 0 : i32
    %c0_i32_0 = arith.constant 0 : i32
    return %c0_i32, %arg0 : i32, i32
  }
  func.func @transform_2(%arg0: i32, %arg1: i32) -> (i32, i32) {
    %c0_i32 = arith.constant 0 : i32
    return %arg1, %arg0 : i32, i32
  }
}

</mosaic_0001>

<llo_original>
// kernel: tpu_custom_call.1
$region0: #{tpu_custom_call.1}
  #allocation0 [shape = 'u32[]', space=smem, size = 0x4, offset = 0x4, fixed_abs, tag = 'smem constant byte address 0x4 - core index']
  #allocation1 [shape = 'u32[144,128]{1,0:T(1,128)}', space=vmem, size = 0x12000, scoped, tag = 'internal scratch']
  %s0 = inlined_call_operand.hbm [shape: f32[2,256], index: 0, kind: input, shape index: {}]
  %s1 = inlined_call_operand.hbm [shape: f32[1,256], index: 1, kind: input, shape index: {}]
  %s2 = inlined_call_operand.hbm [shape: f32[2,256], index: 2, kind: output, shape index: {}]
  %s3 = sld [smem:[#allocation0]]
  $region49: #{tpu_custom_call.1} parent=0
    _
  %s5 = ssub.s32 1, %s3
  %s6 = scalar_select 0, %s5, %s3
  $region1: #{tpu_custom_call.1} parent=0
    #allocation2 [shape = 'u8[2048]{0}', space=vmem, size = 0x800, scoped, tag = 'input window, operand 0']
    #allocation3 [shape = 's32[2]{0}', space=sflag, size = 0x8, scoped, tag = 'scoped memory for tpu_custom_call.1']
    #allocation4 [shape = 's32[2]{0}', space=sflag, size = 0x8, scoped, tag = 'scoped memory for tpu_custom_call.1']
    #allocation5 [shape = 'u8[1024]{0}', space=vmem, size = 0x400, scoped, tag = 'input window, operand 1']
    #allocation6 [shape = 's32[2]{0}', space=sflag, size = 0x8, scoped, tag = 'scoped memory for tpu_custom_call.1']
    #allocation7 [shape = 'u8[2048]{0}', space=vmem, size = 0x800, scoped, tag = 'output window, operand 0']
    %7 = vsyncpa [#allocation3], 0
    %s8 = scalar_lea.sflag [#allocation3], 1
    %9 = vsyncpa %s8, 0
    %10 = vsyncpa [#allocation6], 0
    %s11 = scalar_lea.sflag [#allocation6], 1
    %12 = vsyncpa %s11, 0
    %13 = vsyncpa [#allocation4], 0
    %s14 = scalar_lea.sflag [#allocation4], 1
    %15 = vsyncpa %s14, 0
    loop: start=0, step=1, limit=4
    $region2: #{tpu_custom_call.1} parent=1 // loop_pre_header
      _
    $region3: #{tpu_custom_call.1} parent=1 // loop_header
      %s17 = sphi 0, %s21
      %p18 = scmp.ge.s32.totalorder %s17, 4
      %s24 = sphi 0, %s36
      %s25 = sphi 0, %s32
      %s26 = sphi 0, %s24
      %s27 = sphi 0, %s25
      %s28 = sphi 0, %s26
      %s29 = sphi 0, %s27
      %s41 = sphi 0, %s43
      %s44 = sphi 0, %s41
      %s45 = sphi 0, %s44
      %s61 = sphi 0, %s45
      %s67 = sphi 0, %s69
      %s70 = sphi 0, %s67
      %s71 = sphi 0, %s70
      %s87 = sphi 0, %s71
      %s95 = sphi 0, %s97
      %s98 = sphi 0, %s95
      %s99 = sphi 0, %s98
      %s115 = sphi 0, %s99
    $region4: #{tpu_custom_call.1} parent=1 // loop_header_branch
      %20 = sbr.rel (%p18) target = $region8
    $region5: #{tpu_custom_call.1} parent=1 // loop_body
      %s22 = ssub.s32 %s17, 1
      %s23 = ssub.s32 %s17, 2
      %s30 = sadd.s32 1, %s25
      %p31 = scmp.ge.s32.totalorder %s30, 1
      %s32 = scalar_select %p31, 0, %s30
      %s33 = sadd.s32 1, %s24
      %s34 = scalar_select %p31, %s33, %s24
      %p35 = scmp.ge.s32.totalorder %s34, 2
      %s36 = scalar_select %p35, 0, %s34
      %s37 = ssub.s32 %s25, %s32
      %s38 = ssub.s32 %s24, %s36
      %s39 = sor.u32 %s37, %s38
      %p40 = scmp.eq.s32.totalorder %s39, 0
      %s42 = sadd.s32 %s41, 1
      %s43 = scalar_select %p40, %s41, %s42
      %p46 = pneg %p40
      %p47 = scmp.eq.s32.totalorder %s17, 1
      %p48 = por %p46, %p47
      %p49 = scmp.ne.s32.totalorder %s41, %s44
      %p50 = scmp.eq.s32.totalorder %s17, 0
      %p51 = por %p49, %p50
      %p52 = scmp.ne.s32.totalorder %s41, %s44
      %p53 = scmp.eq.s32.totalorder %s22, 1
      %p54 = por %p52, %p53
      %p55 = scmp.ne.s32.totalorder %s44, %s45
      %p56 = scmp.eq.s32.totalorder %s22, 0
      %p57 = por %p55, %p56
      %p58 = scmp.ne.s32.totalorder %s44, %s45
      %p59 = scmp.eq.s32.totalorder %s23, 1
      %p60 = por %p58, %p59
      %p62 = scmp.ne.s32.totalorder %s45, %s61
      %p63 = scmp.eq.s32.totalorder %s23, 0
      %p64 = por %p62, %p63
      %s65 = ssub.s32 %s24, %s36
      %p66 = scmp.eq.s32.totalorder %s65, 0
      %s68 = sadd.s32 %s67, 1
      %s69 = scalar_select %p66, %s67, %s68
      %p72 = pneg %p66
      %p73 = scmp.eq.s32.totalorder %s17, 1
      %p74 = por %p72, %p73
      %p75 = scmp.ne.s32.totalorder %s67, %s70
      %p76 = scmp.eq.s32.totalorder %s17, 0
      %p77 = por %p75, %p76
      %p78 = scmp.ne.s32.totalorder %s67, %s70
      %p79 = scmp.eq.s32.totalorder %s22, 1
      %p80 = por %p78, %p79
      %p81 = scmp.ne.s32.totalorder %s70, %s71
      %p82 = scmp.eq.s32.totalorder %s22, 0
      %p83 = por %p81, %p82
      %p84 = scmp.ne.s32.totalorder %s70, %s71
      %p85 = scmp.eq.s32.totalorder %s23, 1
      %p86 = por %p84, %p85
      %p88 = scmp.ne.s32.totalorder %s71, %s87
      %p89 = scmp.eq.s32.totalorder %s23, 0
      %p90 = por %p88, %p89
      %s91 = ssub.s32 %s25, %s32
      %s92 = ssub.s32 %s24, %s36
      %s93 = sor.u32 %s91, %s92
      %p94 = scmp.eq.s32.totalorder %s93, 0
      %s96 = sadd.s32 %s95, 1
      %s97 = scalar_select %p94, %s95, %s96
      %p100 = pneg %p94
      %p101 = scmp.eq.s32.totalorder %s17, 1
      %p102 = por %p100, %p101
      %p103 = scmp.ne.s32.totalorder %s95, %s98
      %p104 = scmp.eq.s32.totalorder %s17, 0
      %p105 = por %p103, %p104
      %p106 = scmp.ne.s32.totalorder %s95, %s98
      %p107 = scmp.eq.s32.totalorder %s22, 1
      %p108 = por %p106, %p107
      %p109 = scmp.ne.s32.totalorder %s98, %s99
      %p110 = scmp.eq.s32.totalorder %s22, 0
      %p111 = por %p109, %p110
      %p112 = scmp.ne.s32.totalorder %s98, %s99
      %p113 = scmp.eq.s32.totalorder %s23, 1
      %p114 = por %p112, %p113
      %p116 = scmp.ne.s32.totalorder %s99, %s115
      %p117 = scmp.eq.s32.totalorder %s23, 0
      %p118 = por %p116, %p117
      %p119 = scmp.le.s32.totalorder 1, %s17
      %p120 = scmp.lt.s32.totalorder %s17, 3
      %p121 = pnand %p119, %p120
      %p122 = pneg %p121
      // Predicated region
      $region9: #{tpu_custom_call.1} parent=5 // pred_check
        _
      $region10: #{tpu_custom_call.1} parent=5 // pred_check_branch
        %124 = sbr.rel (%p121) target = $region12
      $region11: #{tpu_custom_call.1} parent=5 // pred_region
        %s125 = ssub.s32 %s17, 1
      $region12: #{tpu_custom_call.1} parent=5 // pred_fallthru
        _
      %p126 = scmp.lt.s32.totalorder %s17, 2
      // Predicated region
      $region13: #{tpu_custom_call.1} parent=5 // pred_check
        %p127 = pneg %p126
      $region14: #{tpu_custom_call.1} parent=5 // pred_check_branch
        %129 = sbr.rel (%p127) target = $region16
      $region15: #{tpu_custom_call.1} parent=5 // pred_region
        // Predicated region
        $region17: #{tpu_custom_call.1} parent=15 // pred_check
          %p130 = pneg %p51
        $region18: #{tpu_custom_call.1} parent=15 // pred_check_branch
          %132 = sbr.rel (%p130) target = $region20
        $region19: #{tpu_custom_call.1} parent=15 // pred_region
          %s133 = sand.u32 %s41, 1
          %s134 = scalar_lea.sflag [#allocation3], %s133
          %s135 = sand.u32 %s41, 1
          %s136 = smul.addr %s135, 2
          %s137 = scalar_lea.vmem [#allocation2], %s136
          %s139 = ssub.s32 32, 32
          %140 = vsyncadd %s134, %s139
          %s141 = smul.addr %s25, 2
          %s142 = sadd.s32 %s24, %s141
          %s143 = smul.addr %s142, 32
          %s144 = scalar_lea.hbm %s0, %s143
          %s146 = sshll.u32 %s137, 4
          %s147 = int_to_ptr.vmem [resolvable:$true] %s146
          %149 = dma.hbm_to_vmem [thread:$0]  %s144, 32, %s147, %s134
        $region20: #{tpu_custom_call.1} parent=15 // pred_fallthru
          _
        // Predicated region
        $region21: #{tpu_custom_call.1} parent=15 // pred_check
          %p150 = pneg %p77
        $region22: #{tpu_custom_call.1} parent=15 // pred_check_branch
          %152 = sbr.rel (%p150) target = $region24
        $region23: #{tpu_custom_call.1} parent=15 // pred_region
          %s153 = sand.u32 %s67, 1
          %s154 = scalar_lea.sflag [#allocation6], %s153
          %s155 = sand.u32 %s67, 1
          %s156 = scalar_lea.vmem [#allocation5], %s155
          %s158 = ssub.s32 16, 16
          %159 = vsyncadd %s154, %s158
          %s160 = smul.addr %s24, 16
          %s161 = scalar_lea.hbm %s1, %s160
          %s163 = sshll.u32 %s156, 4
          %s164 = int_to_ptr.vmem [resolvable:$true] %s163
          %166 = dma.hbm_to_vmem [thread:$0]  %s161, 16, %s164, %s154
        $region24: #{tpu_custom_call.1} parent=15 // pred_fallthru
          _
      $region16: #{tpu_custom_call.1} parent=5 // pred_fallthru
        _
      %p167 = scmp.le.s32.totalorder 1, %s17
      %p168 = scmp.lt.s32.totalorder %s17, 3
      %p169 = pnand %p167, %p168
      %p170 = pneg %p169
      // Predicated region
      $region25: #{tpu_custom_call.1} parent=5 // pred_check
        _
      $region26: #{tpu_custom_call.1} parent=5 // pred_check_branch
        %172 = sbr.rel (%p169) target = $region28
      $region27: #{tpu_custom_call.1} parent=5 // pred_region
        %s173 = ssub.s32 %s17, 1
        %s174 = sand.u32 %s44, 1
        %s175 = scalar_lea.sflag [#allocation3], %s174
        %s176 = sand.u32 %s44, 1
        %s177 = smul.addr %s176, 2
        %s178 = scalar_lea.vmem [#allocation2], %s177
        // Predicated region
        $region29: #{tpu_custom_call.1} parent=27 // pred_check
          %p179 = pneg %p57
        $region30: #{tpu_custom_call.1} parent=27 // pred_check_branch
          %181 = sbr.rel (%p179) target = $region32
        $region31: #{tpu_custom_call.1} parent=27 // pred_region
          %182 = dma.done %s175, 32
        $region32: #{tpu_custom_call.1} parent=27 // pred_fallthru
          _
        %s183 = sand.u32 %s70, 1
        %s184 = scalar_lea.sflag [#allocation6], %s183
        %s185 = sand.u32 %s70, 1
        %s186 = scalar_lea.vmem [#allocation5], %s185
        // Predicated region
        $region33: #{tpu_custom_call.1} parent=27 // pred_check
          %p187 = pneg %p83
        $region34: #{tpu_custom_call.1} parent=27 // pred_check_branch
          %189 = sbr.rel (%p187) target = $region36
        $region35: #{tpu_custom_call.1} parent=27 // pred_region
          %190 = dma.done %s184, 16
        $region36: #{tpu_custom_call.1} parent=27 // pred_fallthru
          _
        %s191 = sand.u32 %s44, 1
        %s192 = scalar_lea.sflag [#allocation3], %s191
        %s193 = sand.u32 %s44, 1
        %s194 = smul.addr %s193, 2
        %s195 = scalar_lea.vmem [#allocation2], %s194
        %p196 = pneg %p57
        %p197 = pneg %p54
        %s198 = sand.u32 %s70, 1
        %s199 = scalar_lea.sflag [#allocation6], %s198
        %s200 = sand.u32 %s70, 1
        %s201 = scalar_lea.vmem [#allocation5], %s200
        %p202 = pneg %p83
        %p203 = pneg %p80
        %p204 = pneg %p111
        %p205 = pneg %p108
        %s206 = sand.u32 %s98, 1
        %s207 = scalar_lea.sflag [#allocation4], %s206
        %s208 = sand.u32 %s98, 1
        %s209 = smul.addr %s208, 2
        %s210 = scalar_lea.vmem [#allocation7], %s209
        %v211 = vld [vmem:[%s178] sm:$0x3]
        %v212 = vmul.f32 %v211, 5.656854
        %v213 = vld [vmem:[%s186] sm:$0x1]
        %v215 = vlaneseq
        %v216 = vshrl.u32 %v215, 7
        %v217 = vsub.s32 0, %v216
        %v218 = vrot.slane %v213, %v217
        %v220 = vadd.f32 %v212, %v218
        %221 = vst [vmem:[%s210] sm:$0x3] %v220
        %s222 = sand.u32 %s98, 1
        %s223 = scalar_lea.sflag [#allocation4], %s222
        %s224 = sand.u32 %s98, 1
        %s225 = smul.addr %s224, 2
        %s226 = scalar_lea.vmem [#allocation7], %s225
        // Predicated region
        $region37: #{tpu_custom_call.1} parent=27 // pred_check
          %p227 = pneg %p108
        $region38: #{tpu_custom_call.1} parent=27 // pred_check_branch
          %229 = sbr.rel (%p227) target = $region40
        $region39: #{tpu_custom_call.1} parent=27 // pred_region
          %s231 = ssub.s32 32, 32
          %232 = vsyncadd %s223, %s231
          %s233 = smul.addr %s27, 2
          %s234 = sadd.s32 %s26, %s233
          %s235 = smul.addr %s234, 32
          %s236 = scalar_lea.hbm %s2, %s235
          %s238 = sshll.u32 %s226, 4
          %s239 = int_to_ptr.vmem [resolvable:$true] %s238
          %241 = dma.vmem_to_hbm [thread:$0]  %s239, 32, %s236, %s223
        $region40: #{tpu_custom_call.1} parent=27 // pred_fallthru
          _
      $region28: #{tpu_custom_call.1} parent=5 // pred_fallthru
        _
      %p242 = scmp.le.s32.totalorder 2, %s17
      // Predicated region
      $region41: #{tpu_custom_call.1} parent=5 // pred_check
        %p243 = pneg %p242
      $region42: #{tpu_custom_call.1} parent=5 // pred_check_branch
        %245 = sbr.rel (%p243) target = $region44
      $region43: #{tpu_custom_call.1} parent=5 // pred_region
        %s246 = ssub.s32 %s17, 2
        // Predicated region
        $region45: #{tpu_custom_call.1} parent=43 // pred_check
          %p247 = pneg %p114
        $region46: #{tpu_custom_call.1} parent=43 // pred_check_branch
          %249 = sbr.rel (%p247) target = $region48
        $region47: #{tpu_custom_call.1} parent=43 // pred_region
          %s250 = sand.u32 %s99, 1
          %s251 = scalar_lea.sflag [#allocation4], %s250
          %s252 = sand.u32 %s99, 1
          %s253 = smul.addr %s252, 2
          %s254 = scalar_lea.vmem [#allocation7], %s253
          %255 = dma.done %s251, 32
        $region48: #{tpu_custom_call.1} parent=43 // pred_fallthru
          _
      $region44: #{tpu_custom_call.1} parent=5 // pred_fallthru
        _
    $region6: #{tpu_custom_call.1} parent=1 // loop_footer
      %s21 = sadd.s32 1, %s17
    $region7: #{tpu_custom_call.1} parent=1 // loop_footer_branch
      %16 = sbr.rel target = $region3
    $region8: #{tpu_custom_call.1} parent=1 // loop_exit
      _
    %256 = vsyncpa [#allocation3], 1
    %s257 = scalar_lea.sflag [#allocation3], 1
    %258 = vsyncpa %s257, 1
    %259 = vsyncpa [#allocation6], 1
    %s260 = scalar_lea.sflag [#allocation6], 1
    %261 = vsyncpa %s260, 1
    %262 = vsyncpa [#allocation4], 1
    %s263 = scalar_lea.sflag [#allocation4], 1
    %264 = vsyncpa %s263, 1

</llo_original>
